<compile_context>
chip_gen: v7x
topology: tpu7x:2x2x1
jax: 0.10.0
libtpu: 0.0.40
codegen_flags: <defaults>
</compile_context>

<pallas_src>
import math
import numpy as np
import jax
import jax.numpy as jnp
from jax import lax
from jax.experimental import pallas as pl
from jax.experimental.pallas import tpu as pltpu

SCALES = [3, 7, 15, 31]
NTAPS = max(SCALES)              # 31: all per-scale kernels embedded in one window
MAXPAD = NTAPS // 2              # 15: logical halo of the combined conv
HALO = 16                        # physical halo (>= MAXPAD), sublane-aligned
LANE = 128                       # TPU lane width
MAX_BLOCK_ELEMS = 1 << 20        # ~1M f32 elems per block  (~28 B/elem VMEM footprint)
VMEM_LIMIT_BYTES = 48 * 1024 * 1024


# ---------------------------------------------------------------------------
# Pallas kernel: fused 31-tap depthwise conv + bias + seasonal residual
# ---------------------------------------------------------------------------
def make_decomp_kernel(TB, L, TD):
    LO = HALO - MAXPAD           # = 1: row offset of tap j=0 inside xpad

    def kernel(x_ref, w_ref, b_ref, seas_ref, trend_ref, xpad):
        # x_ref : (TB, L, TD)            VMEM  input block (lane-dense channels)
        # w_ref : (NTAPS, TD)            VMEM  combined taps (softmax-mixed, c-scaled)
        # b_ref : (1, TD)                VMEM  combined per-channel bias
        # xpad  : (TB, L + 2*HALO, TD)   VMEM  scratch with zero halo rows
        zeros_halo = jnp.zeros((TB, HALO, TD), jnp.float32)
        xpad[:, :HALO, :] = zeros_halo          # top halo (re-zeroed each step: cheap,
        xpad[:, HALO + L:, :] = zeros_halo      # and megacore-safe — see header note)

        x = x_ref[...]                           # (TB, L, TD)
        xpad[:, HALO:HALO + L, :] = x            # aligned interior copy (row 16)

        def win(j):                              # tap-j window of the padded input
            s = LO + j
            return xpad[:, s:s + L, :]           # (TB, L, TD)

        # Four independent accumulator chains (fills the 4 VALU slots), bias added once.
        acc = [win(k) * w_ref[k, :] for k in range(4)]
        for j in range(4, NTAPS):                # static unroll, 31 taps total
            acc[j % 4] = acc[j % 4] + win(j) * w_ref[j, :]
        trend = ((acc[0] + acc[1]) + (acc[2] + acc[3])) + b_ref[0, :]

        trend_ref[...] = trend
        seas_ref[...] = x - trend

    return kernel


# ---------------------------------------------------------------------------
# Parameter construction (deterministic, mirrors nn.Module.__init__ shapes)
# ---------------------------------------------------------------------------
def init_params(key, input_dim):
    S = len(SCALES)
    freq_weights = jnp.ones((S,), jnp.float32) / S               # nn.Parameter(ones/len)
    freq_filter = jnp.ones((1, 1, 1), jnp.float32)               # nn.Parameter(ones(1,1,1))
    conv_w, conv_b = [], []
    for i, k in enumerate(SCALES):
        kw, kb = jax.random.split(jax.random.fold_in(key, i))
        bound = 1.0 / math.sqrt(1 * k)                           # PyTorch Conv1d default
        conv_w.append(jax.random.uniform(kw, (input_dim, 1, k), jnp.float32, -bound, bound))
        conv_b.append(jax.random.uniform(kb, (input_dim,), jnp.float32, -bound, bound))
    return freq_weights, freq_filter, conv_w, conv_b


def embed_weights(conv_w, conv_b, D):
    """Pack per-scale (D,1,k) weights into tap-major (S, NTAPS, D) window."""
    S = len(SCALES)
    w_emb = np.zeros((S, NTAPS, D), np.float32)
    b_all = np.zeros((S, D), np.float32)
    for s, k in enumerate(SCALES):
        off = MAXPAD - k // 2
        w_emb[s, off:off + k, :] = np.asarray(conv_w[s])[:, 0, :].T   # (k, D)
        b_all[s, :] = np.asarray(conv_b[s])
    return jnp.asarray(w_emb), jnp.asarray(b_all)


def _choose_td(Dp, L):
    """Largest channel tile in {min(Dp,512),256,128} dividing Dp and fitting VMEM."""
    for td in (min(Dp, 512), 256, 128):
        if td <= Dp and Dp % td == 0 and L * td <= MAX_BLOCK_ELEMS:
            return td
    return 128


# ---------------------------------------------------------------------------
# Forward wrapper
# ---------------------------------------------------------------------------
def adaptive_decomposition(x, params):
    freq_weights, freq_filter, conv_w, conv_b = params
    B, L, D = x.shape

    # --- exact host-side algebra: fold FFT scalar + softmax mix into one conv ---
    sw = jax.nn.softmax(freq_weights)                              # (S,)
    w_emb, b_all = embed_weights(conv_w, conv_b, D)                # (S, 31, D), (S, D)
    c = freq_filter.reshape(()).astype(jnp.float32)                # real scalar filter
    w_comb = (c * jnp.einsum('s,std->td', sw, w_emb)).astype(jnp.float32)   # (31, D)
    b_comb = (sw @ b_all).reshape(1, D).astype(jnp.float32)                  # (1, D)

    # --- lane-dense layout: pad channel axis to a multiple of 128 ---
    Dp = ((D + LANE - 1) // LANE) * LANE
    xf = x.astype(jnp.float32)
    if Dp != D:
        pad = Dp - D
        xf = jnp.pad(xf, ((0, 0), (0, 0), (0, pad)))
        w_comb = jnp.pad(w_comb, ((0, 0), (0, pad)))               # zero taps -> zero trend
        b_comb = jnp.pad(b_comb, ((0, 0), (0, pad)))               # zero bias in padded lanes

    # --- tile sizes: channel tile TD, batch tile TB (bounded by VMEM footprint) ---
    TD = _choose_td(Dp, L)
    TB = max(1, min(B, MAX_BLOCK_ELEMS // (L * TD)))
    while B % TB:
        TB -= 1

    grid = (B // TB, Dp // TD)
    kernel = make_decomp_kernel(TB, L, TD)
    seasonal, trend = pl.pallas_call(
        kernel,
        out_shape=(
            jax.ShapeDtypeStruct((B, L, Dp), jnp.float32),
            jax.ShapeDtypeStruct((B, L, Dp), jnp.float32),
        ),
        grid_spec=pltpu.PrefetchScalarGridSpec(
            num_scalar_prefetch=0,
            grid=grid,
            in_specs=[
                pl.BlockSpec((TB, L, TD), lambda ib, id_: (ib, 0, id_)),   # x
                pl.BlockSpec((NTAPS, TD), lambda ib, id_: (0, id_)),       # combined taps
                pl.BlockSpec((1, TD), lambda ib, id_: (0, id_)),           # combined bias
            ],
            out_specs=[
                pl.BlockSpec((TB, L, TD), lambda ib, id_: (ib, 0, id_)),   # seasonal
                pl.BlockSpec((TB, L, TD), lambda ib, id_: (ib, 0, id_)),   # trend
            ],
            scratch_shapes=[pltpu.VMEM((TB, L + 2 * HALO, TD), jnp.float32)],
        ),
        compiler_params=pltpu.CompilerParams(
            dimension_semantics=("parallel", "parallel"),
            vmem_limit_bytes=VMEM_LIMIT_BYTES),
    )(xf, w_comb, b_comb)

    if Dp != D:
        seasonal = seasonal[:, :, :D]
        trend = trend[:, :, :D]
    return seasonal, trend


# ---------------------------------------------------------------------------
# Pure-JAX reference (full FFT path + per-scale lax depthwise convs)
# ---------------------------------------------------------------------------
def reference(x, params):
    freq_weights, freq_filter, conv_w, conv_b = params
    B, L, D = x.shape
    x_freq = jnp.fft.rfft(x, axis=1) * freq_filter
    x_filtered = jnp.fft.irfft(x_freq, n=L, axis=1)
    xt = jnp.transpose(x_filtered, (0, 2, 1))                        # (B, D, L)
    weights = jax.nn.softmax(freq_weights)
    trend = jnp.zeros_like(x)
    for s, k in enumerate(SCALES):
        out = lax.conv_general_dilated(
            xt, conv_w[s],
            window_strides=(1,), padding=[(k // 2, k // 2)],
            dimension_numbers=("NCH", "OIH", "NCH"),
            feature_group_count=D,
        ) + conv_b[s][None, :, None]
        trend = trend + weights[s] * jnp.transpose(out, (0, 2, 1))
    return x - trend, trend


if __name__ == "__main__":
    B, L, D = 2, 32, 16
    key = jax.random.PRNGKey(0)
    kx, kp = jax.random.split(key)
    x = jax.random.normal(kx, (B, L, D), jnp.float32)
    params = init_params(kp, D)

    seasonal, trend = adaptive_decomposition(x, params)
    jax.block_until_ready((seasonal, trend))

    seas_ref, trend_ref = reference(x, params)
    assert np.allclose(np.asarray(trend), np.asarray(trend_ref), atol=1e-4, rtol=1e-4)
    assert np.allclose(np.asarray(seasonal), np.asarray(seas_ref), atol=1e-4, rtol=1e-4)
    print("KERNEL_OK")
</pallas_src>

<mosaic_0001>
module attributes {stable_mosaic.version = 11 : i64} {
  func.func @kernel(%arg0: i32, %arg1: i32, %arg2: memref<2x32x128xf32, #tpu.memory_space<vmem>>, %arg3: memref<31x128xf32, #tpu.memory_space<vmem>>, %arg4: memref<1x128xf32, #tpu.memory_space<vmem>>, %arg5: memref<2x32x128xf32, #tpu.memory_space<vmem>>, %arg6: memref<2x32x128xf32, #tpu.memory_space<vmem>>, %arg7: memref<2x64x128xf32, #tpu.memory_space<vmem>>) attributes {dimension_semantics = [#tpu.dimension_semantics<parallel>, #tpu.dimension_semantics<parallel>], iteration_bounds = array<i64: 1, 1>, scalar_prefetch = 0 : i64, scratch_operands = 1 : i64, tpu.core_type = #tpu.core_type<tc>, window_params = [{transform_indices = @transform_0, window_bounds = array<i64: 2, 32, 128>}, {transform_indices = @transform_1, window_bounds = array<i64: 31, 128>}, {transform_indices = @transform_2, window_bounds = array<i64: 1, 128>}, {transform_indices = @transform_3, window_bounds = array<i64: 2, 32, 128>}, {transform_indices = @transform_4, window_bounds = array<i64: 2, 32, 128>}]} {
    %cst = arith.constant 0.000000e+00 : f32
    %0 = vector.broadcast %cst : f32 to vector<2x16x128xf32>
    %c0 = arith.constant 0 : index
    %c0_0 = arith.constant 0 : index
    %c0_1 = arith.constant 0 : index
    %1 = vector.load %arg7[%c0, %c0_0, %c0_1] : memref<2x64x128xf32, #tpu.memory_space<vmem>>, vector<2x16x128xf32>
    tpu.vector_store %arg7[%c0, %c0_0, %c0_1], %0 {strides = array<i32>} : memref<2x64x128xf32, #tpu.memory_space<vmem>>, vector<2x16x128xf32>,
    %c0_2 = arith.constant 0 : index
    %c48 = arith.constant 48 : index
    %c0_3 = arith.constant 0 : index
    %2 = vector.load %arg7[%c0_2, %c48, %c0_3] : memref<2x64x128xf32, #tpu.memory_space<vmem>>, vector<2x16x128xf32>
    tpu.vector_store %arg7[%c0_2, %c48, %c0_3], %0 {strides = array<i32>} : memref<2x64x128xf32, #tpu.memory_space<vmem>>, vector<2x16x128xf32>,
    %c0_4 = arith.constant 0 : index
    %c0_5 = arith.constant 0 : index
    %c0_6 = arith.constant 0 : index
    %3 = vector.load %arg2[%c0_4, %c0_5, %c0_6] : memref<2x32x128xf32, #tpu.memory_space<vmem>>, vector<2x32x128xf32>
    %c0_7 = arith.constant 0 : index
    %c16 = arith.constant 16 : index
    %c0_8 = arith.constant 0 : index
    %4 = vector.load %arg7[%c0_7, %c16, %c0_8] : memref<2x64x128xf32, #tpu.memory_space<vmem>>, vector<2x32x128xf32>
    tpu.vector_store %arg7[%c0_7, %c16, %c0_8], %3 {strides = array<i32>} : memref<2x64x128xf32, #tpu.memory_space<vmem>>, vector<2x32x128xf32>,
    %c0_9 = arith.constant 0 : index
    %c1 = arith.constant 1 : index
    %c0_10 = arith.constant 0 : index
    %5 = vector.load %arg7[%c0_9, %c1, %c0_10] : memref<2x64x128xf32, #tpu.memory_space<vmem>>, vector<2x32x128xf32>
    %c0_11 = arith.constant 0 : index
    %c0_12 = arith.constant 0 : index
    %6 = vector.load %arg3[%c0_11, %c0_12] : memref<31x128xf32, #tpu.memory_space<vmem>>, vector<1x128xf32>
    %7 = vector.shape_cast %6 : vector<1x128xf32> to vector<128xf32>
    %8 = vector.shape_cast %7 : vector<128xf32> to vector<1x1x128xf32>
    %9 = vector.broadcast %8 : vector<1x1x128xf32> to vector<2x32x128xf32>
    %10 = arith.mulf %5, %9 : vector<2x32x128xf32>
    %c0_13 = arith.constant 0 : index
    %c2 = arith.constant 2 : index
    %c0_14 = arith.constant 0 : index
    %11 = vector.load %arg7[%c0_13, %c2, %c0_14] : memref<2x64x128xf32, #tpu.memory_space<vmem>>, vector<2x32x128xf32>
    %c1_15 = arith.constant 1 : index
    %c0_16 = arith.constant 0 : index
    %12 = vector.load %arg3[%c1_15, %c0_16] : memref<31x128xf32, #tpu.memory_space<vmem>>, vector<1x128xf32>
    %13 = vector.shape_cast %12 : vector<1x128xf32> to vector<128xf32>
    %14 = vector.shape_cast %13 : vector<128xf32> to vector<1x1x128xf32>
    %15 = vector.broadcast %14 : vector<1x1x128xf32> to vector<2x32x128xf32>
    %16 = arith.mulf %11, %15 : vector<2x32x128xf32>
    %c0_17 = arith.constant 0 : index
    %c3 = arith.constant 3 : index
    %c0_18 = arith.constant 0 : index
    %17 = vector.load %arg7[%c0_17, %c3, %c0_18] : memref<2x64x128xf32, #tpu.memory_space<vmem>>, vector<2x32x128xf32>
    %c2_19 = arith.constant 2 : index
    %c0_20 = arith.constant 0 : index
    %18 = vector.load %arg3[%c2_19, %c0_20] : memref<31x128xf32, #tpu.memory_space<vmem>>, vector<1x128xf32>
    %19 = vector.shape_cast %18 : vector<1x128xf32> to vector<128xf32>
    %20 = vector.shape_cast %19 : vector<128xf32> to vector<1x1x128xf32>
    %21 = vector.broadcast %20 : vector<1x1x128xf32> to vector<2x32x128xf32>
    %22 = arith.mulf %17, %21 : vector<2x32x128xf32>
    %c0_21 = arith.constant 0 : index
    %c4 = arith.constant 4 : index
    %c0_22 = arith.constant 0 : index
    %23 = vector.load %arg7[%c0_21, %c4, %c0_22] : memref<2x64x128xf32, #tpu.memory_space<vmem>>, vector<2x32x128xf32>
    %c3_23 = arith.constant 3 : index
    %c0_24 = arith.constant 0 : index
    %24 = vector.load %arg3[%c3_23, %c0_24] : memref<31x128xf32, #tpu.memory_space<vmem>>, vector<1x128xf32>
    %25 = vector.shape_cast %24 : vector<1x128xf32> to vector<128xf32>
    %26 = vector.shape_cast %25 : vector<128xf32> to vector<1x1x128xf32>
    %27 = vector.broadcast %26 : vector<1x1x128xf32> to vector<2x32x128xf32>
    %28 = arith.mulf %23, %27 : vector<2x32x128xf32>
    %c0_25 = arith.constant 0 : index
    %c5 = arith.constant 5 : index
    %c0_26 = arith.constant 0 : index
    %29 = vector.load %arg7[%c0_25, %c5, %c0_26] : memref<2x64x128xf32, #tpu.memory_space<vmem>>, vector<2x32x128xf32>
    %c4_27 = arith.constant 4 : index
    %c0_28 = arith.constant 0 : index
    %30 = vector.load %arg3[%c4_27, %c0_28] : memref<31x128xf32, #tpu.memory_space<vmem>>, vector<1x128xf32>
    %31 = vector.shape_cast %30 : vector<1x128xf32> to vector<128xf32>
    %32 = vector.shape_cast %31 : vector<128xf32> to vector<1x1x128xf32>
    %33 = vector.broadcast %32 : vector<1x1x128xf32> to vector<2x32x128xf32>
    %34 = arith.mulf %29, %33 : vector<2x32x128xf32>
    %35 = arith.addf %10, %34 : vector<2x32x128xf32>
    %c0_29 = arith.constant 0 : index
    %c6 = arith.constant 6 : index
    %c0_30 = arith.constant 0 : index
    %36 = vector.load %arg7[%c0_29, %c6, %c0_30] : memref<2x64x128xf32, #tpu.memory_space<vmem>>, vector<2x32x128xf32>
    %c5_31 = arith.constant 5 : index
    %c0_32 = arith.constant 0 : index
    %37 = vector.load %arg3[%c5_31, %c0_32] : memref<31x128xf32, #tpu.memory_space<vmem>>, vector<1x128xf32>
    %38 = vector.shape_cast %37 : vector<1x128xf32> to vector<128xf32>
    %39 = vector.shape_cast %38 : vector<128xf32> to vector<1x1x128xf32>
    %40 = vector.broadcast %39 : vector<1x1x128xf32> to vector<2x32x128xf32>
    %41 = arith.mulf %36, %40 : vector<2x32x128xf32>
    %42 = arith.addf %16, %41 : vector<2x32x128xf32>
    %c0_33 = arith.constant 0 : index
    %c7 = arith.constant 7 : index
    %c0_34 = arith.constant 0 : index
    %43 = vector.load %arg7[%c0_33, %c7, %c0_34] : memref<2x64x128xf32, #tpu.memory_space<vmem>>, vector<2x32x128xf32>
    %c6_35 = arith.constant 6 : index
    %c0_36 = arith.constant 0 : index
    %44 = vector.load %arg3[%c6_35, %c0_36] : memref<31x128xf32, #tpu.memory_space<vmem>>, vector<1x128xf32>
    %45 = vector.shape_cast %44 : vector<1x128xf32> to vector<128xf32>
    %46 = vector.shape_cast %45 : vector<128xf32> to vector<1x1x128xf32>
    %47 = vector.broadcast %46 : vector<1x1x128xf32> to vector<2x32x128xf32>
    %48 = arith.mulf %43, %47 : vector<2x32x128xf32>
    %49 = arith.addf %22, %48 : vector<2x32x128xf32>
    %c0_37 = arith.constant 0 : index
    %c8 = arith.constant 8 : index
    %c0_38 = arith.constant 0 : index
    %50 = vector.load %arg7[%c0_37, %c8, %c0_38] : memref<2x64x128xf32, #tpu.memory_space<vmem>>, vector<2x32x128xf32>
    %c7_39 = arith.constant 7 : index
    %c0_40 = arith.constant 0 : index
    %51 = vector.load %arg3[%c7_39, %c0_40] : memref<31x128xf32, #tpu.memory_space<vmem>>, vector<1x128xf32>
    %52 = vector.shape_cast %51 : vector<1x128xf32> to vector<128xf32>
    %53 = vector.shape_cast %52 : vector<128xf32> to vector<1x1x128xf32>
    %54 = vector.broadcast %53 : vector<1x1x128xf32> to vector<2x32x128xf32>
    %55 = arith.mulf %50, %54 : vector<2x32x128xf32>
    %56 = arith.addf %28, %55 : vector<2x32x128xf32>
    %c0_41 = arith.constant 0 : index
    %c9 = arith.constant 9 : index
    %c0_42 = arith.constant 0 : index
    %57 = vector.load %arg7[%c0_41, %c9, %c0_42] : memref<2x64x128xf32, #tpu.memory_space<vmem>>, vector<2x32x128xf32>
    %c8_43 = arith.constant 8 : index
    %c0_44 = arith.constant 0 : index
    %58 = vector.load %arg3[%c8_43, %c0_44] : memref<31x128xf32, #tpu.memory_space<vmem>>, vector<1x128xf32>
    %59 = vector.shape_cast %58 : vector<1x128xf32> to vector<128xf32>
    %60 = vector.shape_cast %59 : vector<128xf32> to vector<1x1x128xf32>
    %61 = vector.broadcast %60 : vector<1x1x128xf32> to vector<2x32x128xf32>
    %62 = arith.mulf %57, %61 : vector<2x32x128xf32>
    %63 = arith.addf %35, %62 : vector<2x32x128xf32>
    %c0_45 = arith.constant 0 : index
    %c10 = arith.constant 10 : index
    %c0_46 = arith.constant 0 : index
    %64 = vector.load %arg7[%c0_45, %c10, %c0_46] : memref<2x64x128xf32, #tpu.memory_space<vmem>>, vector<2x32x128xf32>
    %c9_47 = arith.constant 9 : index
    %c0_48 = arith.constant 0 : index
    %65 = vector.load %arg3[%c9_47, %c0_48] : memref<31x128xf32, #tpu.memory_space<vmem>>, vector<1x128xf32>
    %66 = vector.shape_cast %65 : vector<1x128xf32> to vector<128xf32>
    %67 = vector.shape_cast %66 : vector<128xf32> to vector<1x1x128xf32>
    %68 = vector.broadcast %67 : vector<1x1x128xf32> to vector<2x32x128xf32>
    %69 = arith.mulf %64, %68 : vector<2x32x128xf32>
    %70 = arith.addf %42, %69 : vector<2x32x128xf32>
    %c0_49 = arith.constant 0 : index
    %c11 = arith.constant 11 : index
    %c0_50 = arith.constant 0 : index
    %71 = vector.load %arg7[%c0_49, %c11, %c0_50] : memref<2x64x128xf32, #tpu.memory_space<vmem>>, vector<2x32x128xf32>
    %c10_51 = arith.constant 10 : index
    %c0_52 = arith.constant 0 : index
    %72 = vector.load %arg3[%c10_51, %c0_52] : memref<31x128xf32, #tpu.memory_space<vmem>>, vector<1x128xf32>
    %73 = vector.shape_cast %72 : vector<1x128xf32> to vector<128xf32>
    %74 = vector.shape_cast %73 : vector<128xf32> to vector<1x1x128xf32>
    %75 = vector.broadcast %74 : vector<1x1x128xf32> to vector<2x32x128xf32>
    %76 = arith.mulf %71, %75 : vector<2x32x128xf32>
    %77 = arith.addf %49, %76 : vector<2x32x128xf32>
    %c0_53 = arith.constant 0 : index
    %c12 = arith.constant 12 : index
    %c0_54 = arith.constant 0 : index
    %78 = vector.load %arg7[%c0_53, %c12, %c0_54] : memref<2x64x128xf32, #tpu.memory_space<vmem>>, vector<2x32x128xf32>
    %c11_55 = arith.constant 11 : index
    %c0_56 = arith.constant 0 : index
    %79 = vector.load %arg3[%c11_55, %c0_56] : memref<31x128xf32, #tpu.memory_space<vmem>>, vector<1x128xf32>
    %80 = vector.shape_cast %79 : vector<1x128xf32> to vector<128xf32>
    %81 = vector.shape_cast %80 : vector<128xf32> to vector<1x1x128xf32>
    %82 = vector.broadcast %81 : vector<1x1x128xf32> to vector<2x32x128xf32>
    %83 = arith.mulf %78, %82 : vector<2x32x128xf32>
    %84 = arith.addf %56, %83 : vector<2x32x128xf32>
    %c0_57 = arith.constant 0 : index
    %c13 = arith.constant 13 : index
    %c0_58 = arith.constant 0 : index
    %85 = vector.load %arg7[%c0_57, %c13, %c0_58] : memref<2x64x128xf32, #tpu.memory_space<vmem>>, vector<2x32x128xf32>
    %c12_59 = arith.constant 12 : index
    %c0_60 = arith.constant 0 : index
    %86 = vector.load %arg3[%c12_59, %c0_60] : memref<31x128xf32, #tpu.memory_space<vmem>>, vector<1x128xf32>
    %87 = vector.shape_cast %86 : vector<1x128xf32> to vector<128xf32>
    %88 = vector.shape_cast %87 : vector<128xf32> to vector<1x1x128xf32>
    %89 = vector.broadcast %88 : vector<1x1x128xf32> to vector<2x32x128xf32>
    %90 = arith.mulf %85, %89 : vector<2x32x128xf32>
    %91 = arith.addf %63, %90 : vector<2x32x128xf32>
    %c0_61 = arith.constant 0 : index
    %c14 = arith.constant 14 : index
    %c0_62 = arith.constant 0 : index
    %92 = vector.load %arg7[%c0_61, %c14, %c0_62] : memref<2x64x128xf32, #tpu.memory_space<vmem>>, vector<2x32x128xf32>
    %c13_63 = arith.constant 13 : index
    %c0_64 = arith.constant 0 : index
    %93 = vector.load %arg3[%c13_63, %c0_64] : memref<31x128xf32, #tpu.memory_space<vmem>>, vector<1x128xf32>
    %94 = vector.shape_cast %93 : vector<1x128xf32> to vector<128xf32>
    %95 = vector.shape_cast %94 : vector<128xf32> to vector<1x1x128xf32>
    %96 = vector.broadcast %95 : vector<1x1x128xf32> to vector<2x32x128xf32>
    %97 = arith.mulf %92, %96 : vector<2x32x128xf32>
    %98 = arith.addf %70, %97 : vector<2x32x128xf32>
    %c0_65 = arith.constant 0 : index
    %c15 = arith.constant 15 : index
    %c0_66 = arith.constant 0 : index
    %99 = vector.load %arg7[%c0_65, %c15, %c0_66] : memref<2x64x128xf32, #tpu.memory_space<vmem>>, vector<2x32x128xf32>
    %c14_67 = arith.constant 14 : index
    %c0_68 = arith.constant 0 : index
    %100 = vector.load %arg3[%c14_67, %c0_68] : memref<31x128xf32, #tpu.memory_space<vmem>>, vector<1x128xf32>
    %101 = vector.shape_cast %100 : vector<1x128xf32> to vector<128xf32>
    %102 = vector.shape_cast %101 : vector<128xf32> to vector<1x1x128xf32>
    %103 = vector.broadcast %102 : vector<1x1x128xf32> to vector<2x32x128xf32>
    %104 = arith.mulf %99, %103 : vector<2x32x128xf32>
    %105 = arith.addf %77, %104 : vector<2x32x128xf32>
    %c0_69 = arith.constant 0 : index
    %c16_70 = arith.constant 16 : index
    %c0_71 = arith.constant 0 : index
    %106 = vector.load %arg7[%c0_69, %c16_70, %c0_71] : memref<2x64x128xf32, #tpu.memory_space<vmem>>, vector<2x32x128xf32>
    %c15_72 = arith.constant 15 : index
    %c0_73 = arith.constant 0 : index
    %107 = vector.load %arg3[%c15_72, %c0_73] : memref<31x128xf32, #tpu.memory_space<vmem>>, vector<1x128xf32>
    %108 = vector.shape_cast %107 : vector<1x128xf32> to vector<128xf32>
    %109 = vector.shape_cast %108 : vector<128xf32> to vector<1x1x128xf32>
    %110 = vector.broadcast %109 : vector<1x1x128xf32> to vector<2x32x128xf32>
    %111 = arith.mulf %106, %110 : vector<2x32x128xf32>
    %112 = arith.addf %84, %111 : vector<2x32x128xf32>
    %c0_74 = arith.constant 0 : index
    %c17 = arith.constant 17 : index
    %c0_75 = arith.constant 0 : index
    %113 = vector.load %arg7[%c0_74, %c17, %c0_75] : memref<2x64x128xf32, #tpu.memory_space<vmem>>, vector<2x32x128xf32>
    %c16_76 = arith.constant 16 : index
    %c0_77 = arith.constant 0 : index
    %114 = vector.load %arg3[%c16_76, %c0_77] : memref<31x128xf32, #tpu.memory_space<vmem>>, vector<1x128xf32>
    %115 = vector.shape_cast %114 : vector<1x128xf32> to vector<128xf32>
    %116 = vector.shape_cast %115 : vector<128xf32> to vector<1x1x128xf32>
    %117 = vector.broadcast %116 : vector<1x1x128xf32> to vector<2x32x128xf32>
    %118 = arith.mulf %113, %117 : vector<2x32x128xf32>
    %119 = arith.addf %91, %118 : vector<2x32x128xf32>
    %c0_78 = arith.constant 0 : index
    %c18 = arith.constant 18 : index
    %c0_79 = arith.constant 0 : index
    %120 = vector.load %arg7[%c0_78, %c18, %c0_79] : memref<2x64x128xf32, #tpu.memory_space<vmem>>, vector<2x32x128xf32>
    %c17_80 = arith.constant 17 : index
    %c0_81 = arith.constant 0 : index
    %121 = vector.load %arg3[%c17_80, %c0_81] : memref<31x128xf32, #tpu.memory_space<vmem>>, vector<1x128xf32>
    %122 = vector.shape_cast %121 : vector<1x128xf32> to vector<128xf32>
    %123 = vector.shape_cast %122 : vector<128xf32> to vector<1x1x128xf32>
    %124 = vector.broadcast %123 : vector<1x1x128xf32> to vector<2x32x128xf32>
    %125 = arith.mulf %120, %124 : vector<2x32x128xf32>
    %126 = arith.addf %98, %125 : vector<2x32x128xf32>
    %c0_82 = arith.constant 0 : index
    %c19 = arith.constant 19 : index
    %c0_83 = arith.constant 0 : index
    %127 = vector.load %arg7[%c0_82, %c19, %c0_83] : memref<2x64x128xf32, #tpu.memory_space<vmem>>, vector<2x32x128xf32>
    %c18_84 = arith.constant 18 : index
    %c0_85 = arith.constant 0 : index
    %128 = vector.load %arg3[%c18_84, %c0_85] : memref<31x128xf32, #tpu.memory_space<vmem>>, vector<1x128xf32>
    %129 = vector.shape_cast %128 : vector<1x128xf32> to vector<128xf32>
    %130 = vector.shape_cast %129 : vector<128xf32> to vector<1x1x128xf32>
    %131 = vector.broadcast %130 : vector<1x1x128xf32> to vector<2x32x128xf32>
    %132 = arith.mulf %127, %131 : vector<2x32x128xf32>
    %133 = arith.addf %105, %132 : vector<2x32x128xf32>
    %c0_86 = arith.constant 0 : index
    %c20 = arith.constant 20 : index
    %c0_87 = arith.constant 0 : index
    %134 = vector.load %arg7[%c0_86, %c20, %c0_87] : memref<2x64x128xf32, #tpu.memory_space<vmem>>, vector<2x32x128xf32>
    %c19_88 = arith.constant 19 : index
    %c0_89 = arith.constant 0 : index
    %135 = vector.load %arg3[%c19_88, %c0_89] : memref<31x128xf32, #tpu.memory_space<vmem>>, vector<1x128xf32>
    %136 = vector.shape_cast %135 : vector<1x128xf32> to vector<128xf32>
    %137 = vector.shape_cast %136 : vector<128xf32> to vector<1x1x128xf32>
    %138 = vector.broadcast %137 : vector<1x1x128xf32> to vector<2x32x128xf32>
    %139 = arith.mulf %134, %138 : vector<2x32x128xf32>
    %140 = arith.addf %112, %139 : vector<2x32x128xf32>
    %c0_90 = arith.constant 0 : index
    %c21 = arith.constant 21 : index
    %c0_91 = arith.constant 0 : index
    %141 = vector.load %arg7[%c0_90, %c21, %c0_91] : memref<2x64x128xf32, #tpu.memory_space<vmem>>, vector<2x32x128xf32>
    %c20_92 = arith.constant 20 : index
    %c0_93 = arith.constant 0 : index
    %142 = vector.load %arg3[%c20_92, %c0_93] : memref<31x128xf32, #tpu.memory_space<vmem>>, vector<1x128xf32>
    %143 = vector.shape_cast %142 : vector<1x128xf32> to vector<128xf32>
    %144 = vector.shape_cast %143 : vector<128xf32> to vector<1x1x128xf32>
    %145 = vector.broadcast %144 : vector<1x1x128xf32> to vector<2x32x128xf32>
    %146 = arith.mulf %141, %145 : vector<2x32x128xf32>
    %147 = arith.addf %119, %146 : vector<2x32x128xf32>
    %c0_94 = arith.constant 0 : index
    %c22 = arith.constant 22 : index
    %c0_95 = arith.constant 0 : index
    %148 = vector.load %arg7[%c0_94, %c22, %c0_95] : memref<2x64x128xf32, #tpu.memory_space<vmem>>, vector<2x32x128xf32>
    %c21_96 = arith.constant 21 : index
    %c0_97 = arith.constant 0 : index
    %149 = vector.load %arg3[%c21_96, %c0_97] : memref<31x128xf32, #tpu.memory_space<vmem>>, vector<1x128xf32>
    %150 = vector.shape_cast %149 : vector<1x128xf32> to vector<128xf32>
    %151 = vector.shape_cast %150 : vector<128xf32> to vector<1x1x128xf32>
    %152 = vector.broadcast %151 : vector<1x1x128xf32> to vector<2x32x128xf32>
    %153 = arith.mulf %148, %152 : vector<2x32x128xf32>
    %154 = arith.addf %126, %153 : vector<2x32x128xf32>
    %c0_98 = arith.constant 0 : index
    %c23 = arith.constant 23 : index
    %c0_99 = arith.constant 0 : index
    %155 = vector.load %arg7[%c0_98, %c23, %c0_99] : memref<2x64x128xf32, #tpu.memory_space<vmem>>, vector<2x32x128xf32>
    %c22_100 = arith.constant 22 : index
    %c0_101 = arith.constant 0 : index
    %156 = vector.load %arg3[%c22_100, %c0_101] : memref<31x128xf32, #tpu.memory_space<vmem>>, vector<1x128xf32>
    %157 = vector.shape_cast %156 : vector<1x128xf32> to vector<128xf32>
    %158 = vector.shape_cast %157 : vector<128xf32> to vector<1x1x128xf32>
    %159 = vector.broadcast %158 : vector<1x1x128xf32> to vector<2x32x128xf32>
    %160 = arith.mulf %155, %159 : vector<2x32x128xf32>
    %161 = arith.addf %133, %160 : vector<2x32x128xf32>
    %c0_102 = arith.constant 0 : index
    %c24 = arith.constant 24 : index
    %c0_103 = arith.constant 0 : index
    %162 = vector.load %arg7[%c0_102, %c24, %c0_103] : memref<2x64x128xf32, #tpu.memory_space<vmem>>, vector<2x32x128xf32>
    %c23_104 = arith.constant 23 : index
    %c0_105 = arith.constant 0 : index
    %163 = vector.load %arg3[%c23_104, %c0_105] : memref<31x128xf32, #tpu.memory_space<vmem>>, vector<1x128xf32>
    %164 = vector.shape_cast %163 : vector<1x128xf32> to vector<128xf32>
    %165 = vector.shape_cast %164 : vector<128xf32> to vector<1x1x128xf32>
    %166 = vector.broadcast %165 : vector<1x1x128xf32> to vector<2x32x128xf32>
    %167 = arith.mulf %162, %166 : vector<2x32x128xf32>
    %168 = arith.addf %140, %167 : vector<2x32x128xf32>
    %c0_106 = arith.constant 0 : index
    %c25 = arith.constant 25 : index
    %c0_107 = arith.constant 0 : index
    %169 = vector.load %arg7[%c0_106, %c25, %c0_107] : memref<2x64x128xf32, #tpu.memory_space<vmem>>, vector<2x32x128xf32>
    %c24_108 = arith.constant 24 : index
    %c0_109 = arith.constant 0 : index
    %170 = vector.load %arg3[%c24_108, %c0_109] : memref<31x128xf32, #tpu.memory_space<vmem>>, vector<1x128xf32>
    %171 = vector.shape_cast %170 : vector<1x128xf32> to vector<128xf32>
    %172 = vector.shape_cast %171 : vector<128xf32> to vector<1x1x128xf32>
    %173 = vector.broadcast %172 : vector<1x1x128xf32> to vector<2x32x128xf32>
    %174 = arith.mulf %169, %173 : vector<2x32x128xf32>
    %175 = arith.addf %147, %174 : vector<2x32x128xf32>
    %c0_110 = arith.constant 0 : index
    %c26 = arith.constant 26 : index
    %c0_111 = arith.constant 0 : index
    %176 = vector.load %arg7[%c0_110, %c26, %c0_111] : memref<2x64x128xf32, #tpu.memory_space<vmem>>, vector<2x32x128xf32>
    %c25_112 = arith.constant 25 : index
    %c0_113 = arith.constant 0 : index
    %177 = vector.load %arg3[%c25_112, %c0_113] : memref<31x128xf32, #tpu.memory_space<vmem>>, vector<1x128xf32>
    %178 = vector.shape_cast %177 : vector<1x128xf32> to vector<128xf32>
    %179 = vector.shape_cast %178 : vector<128xf32> to vector<1x1x128xf32>
    %180 = vector.broadcast %179 : vector<1x1x128xf32> to vector<2x32x128xf32>
    %181 = arith.mulf %176, %180 : vector<2x32x128xf32>
    %182 = arith.addf %154, %181 : vector<2x32x128xf32>
    %c0_114 = arith.constant 0 : index
    %c27 = arith.constant 27 : index
    %c0_115 = arith.constant 0 : index
    %183 = vector.load %arg7[%c0_114, %c27, %c0_115] : memref<2x64x128xf32, #tpu.memory_space<vmem>>, vector<2x32x128xf32>
    %c26_116 = arith.constant 26 : index
    %c0_117 = arith.constant 0 : index
    %184 = vector.load %arg3[%c26_116, %c0_117] : memref<31x128xf32, #tpu.memory_space<vmem>>, vector<1x128xf32>
    %185 = vector.shape_cast %184 : vector<1x128xf32> to vector<128xf32>
    %186 = vector.shape_cast %185 : vector<128xf32> to vector<1x1x128xf32>
    %187 = vector.broadcast %186 : vector<1x1x128xf32> to vector<2x32x128xf32>
    %188 = arith.mulf %183, %187 : vector<2x32x128xf32>
    %189 = arith.addf %161, %188 : vector<2x32x128xf32>
    %c0_118 = arith.constant 0 : index
    %c28 = arith.constant 28 : index
    %c0_119 = arith.constant 0 : index
    %190 = vector.load %arg7[%c0_118, %c28, %c0_119] : memref<2x64x128xf32, #tpu.memory_space<vmem>>, vector<2x32x128xf32>
    %c27_120 = arith.constant 27 : index
    %c0_121 = arith.constant 0 : index
    %191 = vector.load %arg3[%c27_120, %c0_121] : memref<31x128xf32, #tpu.memory_space<vmem>>, vector<1x128xf32>
    %192 = vector.shape_cast %191 : vector<1x128xf32> to vector<128xf32>
    %193 = vector.shape_cast %192 : vector<128xf32> to vector<1x1x128xf32>
    %194 = vector.broadcast %193 : vector<1x1x128xf32> to vector<2x32x128xf32>
    %195 = arith.mulf %190, %194 : vector<2x32x128xf32>
    %196 = arith.addf %168, %195 : vector<2x32x128xf32>
    %c0_122 = arith.constant 0 : index
    %c29 = arith.constant 29 : index
    %c0_123 = arith.constant 0 : index
    %197 = vector.load %arg7[%c0_122, %c29, %c0_123] : memref<2x64x128xf32, #tpu.memory_space<vmem>>, vector<2x32x128xf32>
    %c28_124 = arith.constant 28 : index
    %c0_125 = arith.constant 0 : index
    %198 = vector.load %arg3[%c28_124, %c0_125] : memref<31x128xf32, #tpu.memory_space<vmem>>, vector<1x128xf32>
    %199 = vector.shape_cast %198 : vector<1x128xf32> to vector<128xf32>
    %200 = vector.shape_cast %199 : vector<128xf32> to vector<1x1x128xf32>
    %201 = vector.broadcast %200 : vector<1x1x128xf32> to vector<2x32x128xf32>
    %202 = arith.mulf %197, %201 : vector<2x32x128xf32>
    %203 = arith.addf %175, %202 : vector<2x32x128xf32>
    %c0_126 = arith.constant 0 : index
    %c30 = arith.constant 30 : index
    %c0_127 = arith.constant 0 : index
    %204 = vector.load %arg7[%c0_126, %c30, %c0_127] : memref<2x64x128xf32, #tpu.memory_space<vmem>>, vector<2x32x128xf32>
    %c29_128 = arith.constant 29 : index
    %c0_129 = arith.constant 0 : index
    %205 = vector.load %arg3[%c29_128, %c0_129] : memref<31x128xf32, #tpu.memory_space<vmem>>, vector<1x128xf32>
    %206 = vector.shape_cast %205 : vector<1x128xf32> to vector<128xf32>
    %207 = vector.shape_cast %206 : vector<128xf32> to vector<1x1x128xf32>
    %208 = vector.broadcast %207 : vector<1x1x128xf32> to vector<2x32x128xf32>
    %209 = arith.mulf %204, %208 : vector<2x32x128xf32>
    %210 = arith.addf %182, %209 : vector<2x32x128xf32>
    %c0_130 = arith.constant 0 : index
    %c31 = arith.constant 31 : index
    %c0_131 = arith.constant 0 : index
    %211 = vector.load %arg7[%c0_130, %c31, %c0_131] : memref<2x64x128xf32, #tpu.memory_space<vmem>>, vector<2x32x128xf32>
    %c30_132 = arith.constant 30 : index
    %c0_133 = arith.constant 0 : index
    %212 = vector.load %arg3[%c30_132, %c0_133] : memref<31x128xf32, #tpu.memory_space<vmem>>, vector<1x128xf32>
    %213 = vector.shape_cast %212 : vector<1x128xf32> to vector<128xf32>
    %214 = vector.shape_cast %213 : vector<128xf32> to vector<1x1x128xf32>
    %215 = vector.broadcast %214 : vector<1x1x128xf32> to vector<2x32x128xf32>
    %216 = arith.mulf %211, %215 : vector<2x32x128xf32>
    %217 = arith.addf %189, %216 : vector<2x32x128xf32>
    %218 = arith.addf %203, %210 : vector<2x32x128xf32>
    %219 = arith.addf %217, %196 : vector<2x32x128xf32>
    %220 = arith.addf %218, %219 : vector<2x32x128xf32>
    %c0_134 = arith.constant 0 : index
    %c0_135 = arith.constant 0 : index
    %221 = vector.load %arg4[%c0_134, %c0_135] : memref<1x128xf32, #tpu.memory_space<vmem>>, vector<1x128xf32>
    %222 = vector.shape_cast %221 : vector<1x128xf32> to vector<128xf32>
    %223 = vector.shape_cast %222 : vector<128xf32> to vector<1x1x128xf32>
    %224 = vector.broadcast %223 : vector<1x1x128xf32> to vector<2x32x128xf32>
    %225 = arith.addf %220, %224 : vector<2x32x128xf32>
    %c0_136 = arith.constant 0 : index
    %c0_137 = arith.constant 0 : index
    %c0_138 = arith.constant 0 : index
    %226 = vector.load %arg6[%c0_136, %c0_137, %c0_138] : memref<2x32x128xf32, #tpu.memory_space<vmem>>, vector<2x32x128xf32>
    tpu.vector_store %arg6[%c0_136, %c0_137, %c0_138], %225 {strides = array<i32>} : memref<2x32x128xf32, #tpu.memory_space<vmem>>, vector<2x32x128xf32>,
    %227 = arith.subf %3, %225 : vector<2x32x128xf32>
    %c0_139 = arith.constant 0 : index
    %c0_140 = arith.constant 0 : index
    %c0_141 = arith.constant 0 : index
    %228 = vector.load %arg5[%c0_139, %c0_140, %c0_141] : memref<2x32x128xf32, #tpu.memory_space<vmem>>, vector<2x32x128xf32>
    tpu.vector_store %arg5[%c0_139, %c0_140, %c0_141], %227 {strides = array<i32>} : memref<2x32x128xf32, #tpu.memory_space<vmem>>, vector<2x32x128xf32>,
    return
  }
  func.func @transform_0(%arg0: i32, %arg1: i32) -> (i32, i32, i32) {
    %c0_i32 = arith.constant 0 : i32
    %c0_i32_0 = arith.constant 0 : i32
    return %arg0, %c0_i32, %arg1 : i32, i32, i32
  }
  func.func @transform_1(%arg0: i32, %arg1: i32) -> (i32, i32) {
    %c0_i32 = arith.constant 0 : i32
    %c0_i32_0 = arith.constant 0 : i32
    return %c0_i32, %arg1 : i32, i32
  }
  func.func @transform_2(%arg0: i32, %arg1: i32) -> (i32, i32) {
    %c0_i32 = arith.constant 0 : i32
    %c0_i32_0 = arith.constant 0 : i32
    return %c0_i32, %arg1 : i32, i32
  }
  func.func @transform_3(%arg0: i32, %arg1: i32) -> (i32, i32, i32) {
    %c0_i32 = arith.constant 0 : i32
    %c0_i32_0 = arith.constant 0 : i32
    return %arg0, %c0_i32, %arg1 : i32, i32, i32
  }
  func.func @transform_4(%arg0: i32, %arg1: i32) -> (i32, i32, i32) {
    %c0_i32 = arith.constant 0 : i32
    %c0_i32_0 = arith.constant 0 : i32
    return %arg0, %c0_i32, %arg1 : i32, i32, i32
  }
}

</mosaic_0001>

<llo_original>
// kernel: tpu_custom_call.1
$region0: #{tpu_custom_call.1}
  #allocation0 [shape = 'u32[]', space=smem, size = 0x4, offset = 0x4, fixed_abs, tag = 'smem constant byte address 0x4 - core index']
  #allocation1 [shape = 'u32[144,128]{1,0:T(1,128)}', space=vmem, size = 0x12000, scoped, tag = 'internal scratch']
  #allocation2 [shape = 'f32[2,64,128]{2,1,0:T(8,128)}', space=vmem, size = 0x10000, scoped, tag = 'scratch operand']
  %s0 = inlined_call_operand.hbm [shape: f32[2,32,128], index: 0, kind: input, shape index: {}]
  %s1 = inlined_call_operand.hbm [shape: f32[31,128], index: 1, kind: input, shape index: {}]
  %s2 = inlined_call_operand.vmem [shape: f32[1,128], index: 2, kind: input, shape index: {}]
  %s3 = inlined_call_operand.hbm [shape: f32[2,32,128], index: 3, kind: output, shape index: {0}]
  %s4 = inlined_call_operand.hbm [shape: f32[2,32,128], index: 4, kind: output, shape index: {1}]
  %5 = xla_tuple %s3, %s4
  %s6 = sld [smem:[#allocation0]]
  $region38: #{tpu_custom_call.1} parent=0
    _
  %s8 = ssub.s32 1, %s6
  %s9 = scalar_select 0, %s8, %s6
  $region1: #{tpu_custom_call.1} parent=0
    #allocation3 [shape = 'u8[32768]{0}', space=vmem, size = 0x8000, scoped, tag = 'input window, operand 0, single buffered']
    #allocation4 [shape = 's32[1]{0}', space=sflag, size = 0x4, scoped, tag = 'scoped memory for tpu_custom_call.1']
    #allocation5 [shape = 's32[1]{0}', space=sflag, size = 0x4, scoped, tag = 'scoped memory for tpu_custom_call.1']
    #allocation6 [shape = 'u8[16384]{0}', space=vmem, size = 0x4000, scoped, tag = 'input window, operand 1, single buffered']
    #allocation7 [shape = 's32[1]{0}', space=sflag, size = 0x4, scoped, tag = 'scoped memory for tpu_custom_call.1']
    #allocation8 [shape = 'u8[32768]{0}', space=vmem, size = 0x8000, scoped, tag = 'output window, operand 0, single buffered']
    #allocation9 [shape = 'u8[32768]{0}', space=vmem, size = 0x8000, scoped, tag = 'output window, operand 1, single buffered']
    #allocation10 [shape = 's32[1]{0}', space=sflag, size = 0x4, scoped, tag = 'scoped memory for tpu_custom_call.1']
    %10 = vsyncpa [#allocation4], 0
    %11 = vsyncpa [#allocation7], 0
    %12 = vsyncpa [#allocation5], 0
    %13 = vsyncpa [#allocation10], 0
    // Predicated region
    $region2: #{tpu_custom_call.1} parent=1 // pred_check
      _
    $region3: #{tpu_custom_call.1} parent=1 // pred_check_branch
      %15 = sbr.rel (0) target = $region5
    $region4: #{tpu_custom_call.1} parent=1 // pred_region
      %s17 = ssub.s32 1024, 1024
      %18 = vsyncadd [#allocation4], %s17
      %s19 = sshll.u32 [#allocation3], 4
      %s20 = int_to_ptr.vmem [resolvable:$true] %s19
      %25 = dma.hbm_to_vmem [thread:$0]  %s0, 1024, %s20, [#allocation4], 128, 128, 8
    $region5: #{tpu_custom_call.1} parent=1 // pred_fallthru
      _
    // Predicated region
    $region6: #{tpu_custom_call.1} parent=1 // pred_check
      _
    $region7: #{tpu_custom_call.1} parent=1 // pred_check_branch
      %27 = sbr.rel (0) target = $region9
    $region8: #{tpu_custom_call.1} parent=1 // pred_region
      %s29 = ssub.s32 512, 512
      %30 = vsyncadd [#allocation7], %s29
      %s31 = sshll.u32 [#allocation6], 4
      %s32 = int_to_ptr.vmem [resolvable:$true] %s31
      %37 = dma.hbm_to_vmem [thread:$0]  %s1, 512, %s32, [#allocation7], 128, 128, 8
    $region9: #{tpu_custom_call.1} parent=1 // pred_fallthru
      _
    // Predicated region
    $region10: #{tpu_custom_call.1} parent=1 // pred_check
      _
    $region11: #{tpu_custom_call.1} parent=1 // pred_check_branch
      %39 = sbr.rel (0) target = $region13
    $region12: #{tpu_custom_call.1} parent=1 // pred_region
      _
    $region13: #{tpu_custom_call.1} parent=1 // pred_fallthru
      _
    // Predicated region
    $region14: #{tpu_custom_call.1} parent=1 // pred_check
      _
    $region15: #{tpu_custom_call.1} parent=1 // pred_check_branch
      %41 = sbr.rel (0) target = $region17
    $region16: #{tpu_custom_call.1} parent=1 // pred_region
      %42 = dma.done [#allocation4], 1024
    $region17: #{tpu_custom_call.1} parent=1 // pred_fallthru
      _
    // Predicated region
    $region18: #{tpu_custom_call.1} parent=1 // pred_check
      _
    $region19: #{tpu_custom_call.1} parent=1 // pred_check_branch
      %44 = sbr.rel (0) target = $region21
    $region20: #{tpu_custom_call.1} parent=1 // pred_region
      %45 = dma.done [#allocation7], 512
    $region21: #{tpu_custom_call.1} parent=1 // pred_fallthru
      _
    %46 = vst [vmem:[#allocation2] sm:$0xff] 0.0
    %47 = vst [vmem:[#allocation2 + $0x8] sm:$0xff] 0.0
    %48 = vst [vmem:[#allocation2 + $0x40] sm:$0xff] 0.0
    %49 = vst [vmem:[#allocation2 + $0x48] sm:$0xff] 0.0
    %50 = vst [vmem:[#allocation2 + $0x30] sm:$0xff] 0.0
    %51 = vst [vmem:[#allocation2 + $0x38] sm:$0xff] 0.0
    %52 = vst [vmem:[#allocation2 + $0x70] sm:$0xff] 0.0
    %53 = vst [vmem:[#allocation2 + $0x78] sm:$0xff] 0.0
    %v54 = vld [vmem:[#allocation3] sm:$0xff]
    %v55 = vld [vmem:[#allocation3 + $0x8] sm:$0xff]
    %v56 = vld [vmem:[#allocation3 + $0x10] sm:$0xff]
    %v57 = vld [vmem:[#allocation3 + $0x18] sm:$0xff]
    %v58 = vld [vmem:[#allocation3 + $0x20] sm:$0xff]
    %v59 = vld [vmem:[#allocation3 + $0x28] sm:$0xff]
    %v60 = vld [vmem:[#allocation3 + $0x30] sm:$0xff]
    %v61 = vld [vmem:[#allocation3 + $0x38] sm:$0xff]
    %62 = vst [vmem:[#allocation2 + $0x10] sm:$0xff] %v54
    %63 = vst [vmem:[#allocation2 + $0x18] sm:$0xff] %v55
    %64 = vst [vmem:[#allocation2 + $0x20] sm:$0xff] %v56
    %65 = vst [vmem:[#allocation2 + $0x28] sm:$0xff] %v57
    %66 = vst [vmem:[#allocation2 + $0x50] sm:$0xff] %v58
    %67 = vst [vmem:[#allocation2 + $0x58] sm:$0xff] %v59
    %68 = vst [vmem:[#allocation2 + $0x60] sm:$0xff] %v60
    %69 = vst [vmem:[#allocation2 + $0x68] sm:$0xff] %v61
    %v70 = vld [vmem:[#allocation2 + $0x1] sm:$0xff]
    %v71 = vld [vmem:[#allocation2 + $0x9] sm:$0xff]
    %v72 = vld [vmem:[#allocation2 + $0x11] sm:$0xff]
    %v73 = vld [vmem:[#allocation2 + $0x19] sm:$0xff]
    %v74 = vld [vmem:[#allocation2 + $0x41] sm:$0xff]
    %v75 = vld [vmem:[#allocation2 + $0x49] sm:$0xff]
    %v76 = vld [vmem:[#allocation2 + $0x51] sm:$0xff]
    %v77 = vld [vmem:[#allocation2 + $0x59] sm:$0xff]
    %v78 = vld [vmem:[#allocation6] sm:$0x1]
    %v79 = vlaneseq
    %v80 = vshrl.u32 %v79, 7
    %v81 = vsub.s32 0, %v80
    %v82 = vrot.slane %v78, %v81
    %v83 = vmul.f32 %v70, %v82
    %v84 = vmul.f32 %v71, %v82
    %v85 = vmul.f32 %v72, %v82
    %v86 = vmul.f32 %v73, %v82
    %v87 = vmul.f32 %v74, %v82
    %v88 = vmul.f32 %v75, %v82
    %v89 = vmul.f32 %v76, %v82
    %v90 = vmul.f32 %v77, %v82
    %v91 = vld [vmem:[#allocation2 + $0x2] sm:$0xff]
    %v92 = vld [vmem:[#allocation2 + $0xa] sm:$0xff]
    %v93 = vld [vmem:[#allocation2 + $0x12] sm:$0xff]
    %v94 = vld [vmem:[#allocation2 + $0x1a] sm:$0xff]
    %v95 = vld [vmem:[#allocation2 + $0x42] sm:$0xff]
    %v96 = vld [vmem:[#allocation2 + $0x4a] sm:$0xff]
    %v97 = vld [vmem:[#allocation2 + $0x52] sm:$0xff]
    %v98 = vld [vmem:[#allocation2 + $0x5a] sm:$0xff]
    %v99 = vld [vmem:[#allocation6 + $0x1] sm:$0x1]
    %v100 = vlaneseq
    %v101 = vshrl.u32 %v100, 7
    %v102 = vsub.s32 0, %v101
    %v103 = vrot.slane %v99, %v102
    %v104 = vmul.f32 %v91, %v103
    %v105 = vmul.f32 %v92, %v103
    %v106 = vmul.f32 %v93, %v103
    %v107 = vmul.f32 %v94, %v103
    %v108 = vmul.f32 %v95, %v103
    %v109 = vmul.f32 %v96, %v103
    %v110 = vmul.f32 %v97, %v103
    %v111 = vmul.f32 %v98, %v103
    %v112 = vld [vmem:[#allocation2 + $0x3] sm:$0xff]
    %v113 = vld [vmem:[#allocation2 + $0xb] sm:$0xff]
    %v114 = vld [vmem:[#allocation2 + $0x13] sm:$0xff]
    %v115 = vld [vmem:[#allocation2 + $0x1b] sm:$0xff]
    %v116 = vld [vmem:[#allocation2 + $0x43] sm:$0xff]
    %v117 = vld [vmem:[#allocation2 + $0x4b] sm:$0xff]
    %v118 = vld [vmem:[#allocation2 + $0x53] sm:$0xff]
    %v119 = vld [vmem:[#allocation2 + $0x5b] sm:$0xff]
    %v120 = vld [vmem:[#allocation6 + $0x2] sm:$0x1]
    %v121 = vlaneseq
    %v122 = vshrl.u32 %v121, 7
    %v123 = vsub.s32 0, %v122
    %v124 = vrot.slane %v120, %v123
    %v125 = vmul.f32 %v112, %v124
    %v126 = vmul.f32 %v113, %v124
    %v127 = vmul.f32 %v114, %v124
    %v128 = vmul.f32 %v115, %v124
    %v129 = vmul.f32 %v116, %v124
    %v130 = vmul.f32 %v117, %v124
    %v131 = vmul.f32 %v118, %v124
    %v132 = vmul.f32 %v119, %v124
    %v133 = vld [vmem:[#allocation2 + $0x4] sm:$0xff]
    %v134 = vld [vmem:[#allocation2 + $0xc] sm:$0xff]
    %v135 = vld [vmem:[#allocation2 + $0x14] sm:$0xff]
    %v136 = vld [vmem:[#allocation2 + $0x1c] sm:$0xff]
    %v137 = vld [vmem:[#allocation2 + $0x44] sm:$0xff]
    %v138 = vld [vmem:[#allocation2 + $0x4c] sm:$0xff]
    %v139 = vld [vmem:[#allocation2 + $0x54] sm:$0xff]
    %v140 = vld [vmem:[#allocation2 + $0x5c] sm:$0xff]
    %v141 = vld [vmem:[#allocation6 + $0x3] sm:$0x1]
    %v142 = vlaneseq
    %v143 = vshrl.u32 %v142, 7
    %v144 = vsub.s32 0, %v143
    %v145 = vrot.slane %v141, %v144
    %v146 = vmul.f32 %v133, %v145
    %v147 = vmul.f32 %v134, %v145
    %v148 = vmul.f32 %v135, %v145
    %v149 = vmul.f32 %v136, %v145
    %v150 = vmul.f32 %v137, %v145
    %v151 = vmul.f32 %v138, %v145
    %v152 = vmul.f32 %v139, %v145
    %v153 = vmul.f32 %v140, %v145
    %v154 = vld [vmem:[#allocation2 + $0x5] sm:$0xff]
    %v155 = vld [vmem:[#allocation2 + $0xd] sm:$0xff]
    %v156 = vld [vmem:[#allocation2 + $0x15] sm:$0xff]
    %v157 = vld [vmem:[#allocation2 + $0x1d] sm:$0xff]
    %v158 = vld [vmem:[#allocation2 + $0x45] sm:$0xff]
    %v159 = vld [vmem:[#allocation2 + $0x4d] sm:$0xff]
    %v160 = vld [vmem:[#allocation2 + $0x55] sm:$0xff]
    %v161 = vld [vmem:[#allocation2 + $0x5d] sm:$0xff]
    %v162 = vld [vmem:[#allocation6 + $0x4] sm:$0x1]
    %v163 = vlaneseq
    %v164 = vshrl.u32 %v163, 7
    %v165 = vsub.s32 0, %v164
    %v166 = vrot.slane %v162, %v165
    %v167 = vmul.f32 %v154, %v166
    %v168 = vmul.f32 %v155, %v166
    %v169 = vmul.f32 %v156, %v166
    %v170 = vmul.f32 %v157, %v166
    %v171 = vmul.f32 %v158, %v166
    %v172 = vmul.f32 %v159, %v166
    %v173 = vmul.f32 %v160, %v166
    %v174 = vmul.f32 %v161, %v166
    %v175 = vadd.f32 %v83, %v167
    %v176 = vadd.f32 %v84, %v168
    %v177 = vadd.f32 %v85, %v169
    %v178 = vadd.f32 %v86, %v170
    %v179 = vadd.f32 %v87, %v171
    %v180 = vadd.f32 %v88, %v172
    %v181 = vadd.f32 %v89, %v173
    %v182 = vadd.f32 %v90, %v174
    %v183 = vld [vmem:[#allocation2 + $0x6] sm:$0xff]
    %v184 = vld [vmem:[#allocation2 + $0xe] sm:$0xff]
    %v185 = vld [vmem:[#allocation2 + $0x16] sm:$0xff]
    %v186 = vld [vmem:[#allocation2 + $0x1e] sm:$0xff]
    %v187 = vld [vmem:[#allocation2 + $0x46] sm:$0xff]
    %v188 = vld [vmem:[#allocation2 + $0x4e] sm:$0xff]
    %v189 = vld [vmem:[#allocation2 + $0x56] sm:$0xff]
    %v190 = vld [vmem:[#allocation2 + $0x5e] sm:$0xff]
    %v191 = vld [vmem:[#allocation6 + $0x5] sm:$0x1]
    %v192 = vlaneseq
    %v193 = vshrl.u32 %v192, 7
    %v194 = vsub.s32 0, %v193
    %v195 = vrot.slane %v191, %v194
    %v196 = vmul.f32 %v183, %v195
    %v197 = vmul.f32 %v184, %v195
    %v198 = vmul.f32 %v185, %v195
    %v199 = vmul.f32 %v186, %v195
    %v200 = vmul.f32 %v187, %v195
    %v201 = vmul.f32 %v188, %v195
    %v202 = vmul.f32 %v189, %v195
    %v203 = vmul.f32 %v190, %v195
    %v204 = vadd.f32 %v104, %v196
    %v205 = vadd.f32 %v105, %v197
    %v206 = vadd.f32 %v106, %v198
    %v207 = vadd.f32 %v107, %v199
    %v208 = vadd.f32 %v108, %v200
    %v209 = vadd.f32 %v109, %v201
    %v210 = vadd.f32 %v110, %v202
    %v211 = vadd.f32 %v111, %v203
    %v212 = vld [vmem:[#allocation2 + $0x7] sm:$0xff]
    %v213 = vld [vmem:[#allocation2 + $0xf] sm:$0xff]
    %v214 = vld [vmem:[#allocation2 + $0x17] sm:$0xff]
    %v215 = vld [vmem:[#allocation2 + $0x1f] sm:$0xff]
    %v216 = vld [vmem:[#allocation2 + $0x47] sm:$0xff]
    %v217 = vld [vmem:[#allocation2 + $0x4f] sm:$0xff]
    %v218 = vld [vmem:[#allocation2 + $0x57] sm:$0xff]
    %v219 = vld [vmem:[#allocation2 + $0x5f] sm:$0xff]
    %v220 = vld [vmem:[#allocation6 + $0x6] sm:$0x1]
    %v221 = vlaneseq
    %v222 = vshrl.u32 %v221, 7
    %v223 = vsub.s32 0, %v222
    %v224 = vrot.slane %v220, %v223
    %v225 = vmul.f32 %v212, %v224
    %v226 = vmul.f32 %v213, %v224
    %v227 = vmul.f32 %v214, %v224
    %v228 = vmul.f32 %v215, %v224
    %v229 = vmul.f32 %v216, %v224
    %v230 = vmul.f32 %v217, %v224
    %v231 = vmul.f32 %v218, %v224
    %v232 = vmul.f32 %v219, %v224
    %v233 = vadd.f32 %v125, %v225
    %v234 = vadd.f32 %v126, %v226
    %v235 = vadd.f32 %v127, %v227
    %v236 = vadd.f32 %v128, %v228
    %v237 = vadd.f32 %v129, %v229
    %v238 = vadd.f32 %v130, %v230
    %v239 = vadd.f32 %v131, %v231
    %v240 = vadd.f32 %v132, %v232
    %v241 = vld [vmem:[#allocation2 + $0x8] sm:$0xff]
    %v242 = vld [vmem:[#allocation2 + $0x10] sm:$0xff]
    %v243 = vld [vmem:[#allocation2 + $0x18] sm:$0xff]
    %v244 = vld [vmem:[#allocation2 + $0x20] sm:$0xff]
    %v245 = vld [vmem:[#allocation2 + $0x48] sm:$0xff]
    %v246 = vld [vmem:[#allocation2 + $0x50] sm:$0xff]
    %v247 = vld [vmem:[#allocation2 + $0x58] sm:$0xff]
    %v248 = vld [vmem:[#allocation2 + $0x60] sm:$0xff]
    %v249 = vld [vmem:[#allocation6 + $0x7] sm:$0x1]
    %v250 = vlaneseq
    %v251 = vshrl.u32 %v250, 7
    %v252 = vsub.s32 0, %v251
    %v253 = vrot.slane %v249, %v252
    %v254 = vmul.f32 %v241, %v253
    %v255 = vmul.f32 %v242, %v253
    %v256 = vmul.f32 %v243, %v253
    %v257 = vmul.f32 %v244, %v253
    %v258 = vmul.f32 %v245, %v253
    %v259 = vmul.f32 %v246, %v253
    %v260 = vmul.f32 %v247, %v253
    %v261 = vmul.f32 %v248, %v253
    %v262 = vadd.f32 %v146, %v254
    %v263 = vadd.f32 %v147, %v255
    %v264 = vadd.f32 %v148, %v256
    %v265 = vadd.f32 %v149, %v257
    %v266 = vadd.f32 %v150, %v258
    %v267 = vadd.f32 %v151, %v259
    %v268 = vadd.f32 %v152, %v260
    %v269 = vadd.f32 %v153, %v261
    %v270 = vld [vmem:[#allocation2 + $0x21] sm:$0xff]
    %v271 = vld [vmem:[#allocation2 + $0x61] sm:$0xff]
    %v272 = vld [vmem:[#allocation6 + $0x8] sm:$0x1]
    %v273 = vlaneseq
    %v274 = vshrl.u32 %v273, 7
    %v275 = vsub.s32 0, %v274
    %v276 = vrot.slane %v272, %v275
    %v277 = vmul.f32 %v71, %v276
    %v278 = vmul.f32 %v72, %v276
    %v279 = vmul.f32 %v73, %v276
    %v280 = vmul.f32 %v270, %v276
    %v281 = vmul.f32 %v75, %v276
    %v282 = vmul.f32 %v76, %v276
    %v283 = vmul.f32 %v77, %v276
    %v284 = vmul.f32 %v271, %v276
    %v285 = vadd.f32 %v175, %v277
    %v286 = vadd.f32 %v176, %v278
    %v287 = vadd.f32 %v177, %v279
    %v288 = vadd.f32 %v178, %v280
    %v289 = vadd.f32 %v179, %v281
    %v290 = vadd.f32 %v180, %v282
    %v291 = vadd.f32 %v181, %v283
    %v292 = vadd.f32 %v182, %v284
    %v293 = vld [vmem:[#allocation2 + $0x22] sm:$0xff]
    %v294 = vld [vmem:[#allocation2 + $0x62] sm:$0xff]
    %v295 = vld [vmem:[#allocation6 + $0x9] sm:$0x1]
    %v296 = vlaneseq
    %v297 = vshrl.u32 %v296, 7
    %v298 = vsub.s32 0, %v297
    %v299 = vrot.slane %v295, %v298
    %v300 = vmul.f32 %v92, %v299
    %v301 = vmul.f32 %v93, %v299
    %v302 = vmul.f32 %v94, %v299
    %v303 = vmul.f32 %v293, %v299
    %v304 = vmul.f32 %v96, %v299
    %v305 = vmul.f32 %v97, %v299
    %v306 = vmul.f32 %v98, %v299
    %v307 = vmul.f32 %v294, %v299
    %v308 = vadd.f32 %v204, %v300
    %v309 = vadd.f32 %v205, %v301
    %v310 = vadd.f32 %v206, %v302
    %v311 = vadd.f32 %v207, %v303
    %v312 = vadd.f32 %v208, %v304
    %v313 = vadd.f32 %v209, %v305
    %v314 = vadd.f32 %v210, %v306
    %v315 = vadd.f32 %v211, %v307
    %v316 = vld [vmem:[#allocation2 + $0x23] sm:$0xff]
    %v317 = vld [vmem:[#allocation2 + $0x63] sm:$0xff]
    %v318 = vld [vmem:[#allocation6 + $0xa] sm:$0x1]
    %v319 = vlaneseq
    %v320 = vshrl.u32 %v319, 7
    %v321 = vsub.s32 0, %v320
    %v322 = vrot.slane %v318, %v321
    %v323 = vmul.f32 %v113, %v322
    %v324 = vmul.f32 %v114, %v322
    %v325 = vmul.f32 %v115, %v322
    %v326 = vmul.f32 %v316, %v322
    %v327 = vmul.f32 %v117, %v322
    %v328 = vmul.f32 %v118, %v322
    %v329 = vmul.f32 %v119, %v322
    %v330 = vmul.f32 %v317, %v322
    %v331 = vadd.f32 %v233, %v323
    %v332 = vadd.f32 %v234, %v324
    %v333 = vadd.f32 %v235, %v325
    %v334 = vadd.f32 %v236, %v326
    %v335 = vadd.f32 %v237, %v327
    %v336 = vadd.f32 %v238, %v328
    %v337 = vadd.f32 %v239, %v329
    %v338 = vadd.f32 %v240, %v330
    %v339 = vld [vmem:[#allocation2 + $0x24] sm:$0xff]
    %v340 = vld [vmem:[#allocation2 + $0x64] sm:$0xff]
    %v341 = vld [vmem:[#allocation6 + $0xb] sm:$0x1]
    %v342 = vlaneseq
    %v343 = vshrl.u32 %v342, 7
    %v344 = vsub.s32 0, %v343
    %v345 = vrot.slane %v341, %v344
    %v346 = vmul.f32 %v134, %v345
    %v347 = vmul.f32 %v135, %v345
    %v348 = vmul.f32 %v136, %v345
    %v349 = vmul.f32 %v339, %v345
    %v350 = vmul.f32 %v138, %v345
    %v351 = vmul.f32 %v139, %v345
    %v352 = vmul.f32 %v140, %v345
    %v353 = vmul.f32 %v340, %v345
    %v354 = vadd.f32 %v262, %v346
    %v355 = vadd.f32 %v263, %v347
    %v356 = vadd.f32 %v264, %v348
    %v357 = vadd.f32 %v265, %v349
    %v358 = vadd.f32 %v266, %v350
    %v359 = vadd.f32 %v267, %v351
    %v360 = vadd.f32 %v268, %v352
    %v361 = vadd.f32 %v269, %v353
    %v362 = vld [vmem:[#allocation2 + $0x25] sm:$0xff]
    %v363 = vld [vmem:[#allocation2 + $0x65] sm:$0xff]
    %v364 = vld [vmem:[#allocation6 + $0xc] sm:$0x1]
    %v365 = vlaneseq
    %v366 = vshrl.u32 %v365, 7
    %v367 = vsub.s32 0, %v366
    %v368 = vrot.slane %v364, %v367
    %v369 = vmul.f32 %v155, %v368
    %v370 = vmul.f32 %v156, %v368
    %v371 = vmul.f32 %v157, %v368
    %v372 = vmul.f32 %v362, %v368
    %v373 = vmul.f32 %v159, %v368
    %v374 = vmul.f32 %v160, %v368
    %v375 = vmul.f32 %v161, %v368
    %v376 = vmul.f32 %v363, %v368
    %v377 = vadd.f32 %v285, %v369
    %v378 = vadd.f32 %v286, %v370
    %v379 = vadd.f32 %v287, %v371
    %v380 = vadd.f32 %v288, %v372
    %v381 = vadd.f32 %v289, %v373
    %v382 = vadd.f32 %v290, %v374
    %v383 = vadd.f32 %v291, %v375
    %v384 = vadd.f32 %v292, %v376
    %v385 = vld [vmem:[#allocation2 + $0x26] sm:$0xff]
    %v386 = vld [vmem:[#allocation2 + $0x66] sm:$0xff]
    %v387 = vld [vmem:[#allocation6 + $0xd] sm:$0x1]
    %v388 = vlaneseq
    %v389 = vshrl.u32 %v388, 7
    %v390 = vsub.s32 0, %v389
    %v391 = vrot.slane %v387, %v390
    %v392 = vmul.f32 %v184, %v391
    %v393 = vmul.f32 %v185, %v391
    %v394 = vmul.f32 %v186, %v391
    %v395 = vmul.f32 %v385, %v391
    %v396 = vmul.f32 %v188, %v391
    %v397 = vmul.f32 %v189, %v391
    %v398 = vmul.f32 %v190, %v391
    %v399 = vmul.f32 %v386, %v391
    %v400 = vadd.f32 %v308, %v392
    %v401 = vadd.f32 %v309, %v393
    %v402 = vadd.f32 %v310, %v394
    %v403 = vadd.f32 %v311, %v395
    %v404 = vadd.f32 %v312, %v396
    %v405 = vadd.f32 %v313, %v397
    %v406 = vadd.f32 %v314, %v398
    %v407 = vadd.f32 %v315, %v399
    %v408 = vld [vmem:[#allocation2 + $0x27] sm:$0xff]
    %v409 = vld [vmem:[#allocation2 + $0x67] sm:$0xff]
    %v410 = vld [vmem:[#allocation6 + $0xe] sm:$0x1]
    %v411 = vlaneseq
    %v412 = vshrl.u32 %v411, 7
    %v413 = vsub.s32 0, %v412
    %v414 = vrot.slane %v410, %v413
    %v415 = vmul.f32 %v213, %v414
    %v416 = vmul.f32 %v214, %v414
    %v417 = vmul.f32 %v215, %v414
    %v418 = vmul.f32 %v408, %v414
    %v419 = vmul.f32 %v217, %v414
    %v420 = vmul.f32 %v218, %v414
    %v421 = vmul.f32 %v219, %v414
    %v422 = vmul.f32 %v409, %v414
    %v423 = vadd.f32 %v331, %v415
    %v424 = vadd.f32 %v332, %v416
    %v425 = vadd.f32 %v333, %v417
    %v426 = vadd.f32 %v334, %v418
    %v427 = vadd.f32 %v335, %v419
    %v428 = vadd.f32 %v336, %v420
    %v429 = vadd.f32 %v337, %v421
    %v430 = vadd.f32 %v338, %v422
    %v431 = vld [vmem:[#allocation2 + $0x28] sm:$0xff]
    %v432 = vld [vmem:[#allocation2 + $0x68] sm:$0xff]
    %v433 = vld [vmem:[#allocation6 + $0xf] sm:$0x1]
    %v434 = vlaneseq
    %v435 = vshrl.u32 %v434, 7
    %v436 = vsub.s32 0, %v435
    %v437 = vrot.slane %v433, %v436
    %v438 = vmul.f32 %v242, %v437
    %v439 = vmul.f32 %v243, %v437
    %v440 = vmul.f32 %v244, %v437
    %v441 = vmul.f32 %v431, %v437
    %v442 = vmul.f32 %v246, %v437
    %v443 = vmul.f32 %v247, %v437
    %v444 = vmul.f32 %v248, %v437
    %v445 = vmul.f32 %v432, %v437
    %v446 = vadd.f32 %v354, %v438
    %v447 = vadd.f32 %v355, %v439
    %v448 = vadd.f32 %v356, %v440
    %v449 = vadd.f32 %v357, %v441
    %v450 = vadd.f32 %v358, %v442
    %v451 = vadd.f32 %v359, %v443
    %v452 = vadd.f32 %v360, %v444
    %v453 = vadd.f32 %v361, %v445
    %v454 = vld [vmem:[#allocation2 + $0x29] sm:$0xff]
    %v455 = vld [vmem:[#allocation2 + $0x69] sm:$0xff]
    %v456 = vld [vmem:[#allocation6 + $0x10] sm:$0x1]
    %v457 = vlaneseq
    %v458 = vshrl.u32 %v457, 7
    %v459 = vsub.s32 0, %v458
    %v460 = vrot.slane %v456, %v459
    %v461 = vmul.f32 %v72, %v460
    %v462 = vmul.f32 %v73, %v460
    %v463 = vmul.f32 %v270, %v460
    %v464 = vmul.f32 %v454, %v460
    %v465 = vmul.f32 %v76, %v460
    %v466 = vmul.f32 %v77, %v460
    %v467 = vmul.f32 %v271, %v460
    %v468 = vmul.f32 %v455, %v460
    %v469 = vadd.f32 %v377, %v461
    %v470 = vadd.f32 %v378, %v462
    %v471 = vadd.f32 %v379, %v463
    %v472 = vadd.f32 %v380, %v464
    %v473 = vadd.f32 %v381, %v465
    %v474 = vadd.f32 %v382, %v466
    %v475 = vadd.f32 %v383, %v467
    %v476 = vadd.f32 %v384, %v468
    %v477 = vld [vmem:[#allocation2 + $0x2a] sm:$0xff]
    %v478 = vld [vmem:[#allocation2 + $0x6a] sm:$0xff]
    %v479 = vld [vmem:[#allocation6 + $0x11] sm:$0x1]
    %v480 = vlaneseq
    %v481 = vshrl.u32 %v480, 7
    %v482 = vsub.s32 0, %v481
    %v483 = vrot.slane %v479, %v482
    %v484 = vmul.f32 %v93, %v483
    %v485 = vmul.f32 %v94, %v483
    %v486 = vmul.f32 %v293, %v483
    %v487 = vmul.f32 %v477, %v483
    %v488 = vmul.f32 %v97, %v483
    %v489 = vmul.f32 %v98, %v483
    %v490 = vmul.f32 %v294, %v483
    %v491 = vmul.f32 %v478, %v483
    %v492 = vadd.f32 %v400, %v484
    %v493 = vadd.f32 %v401, %v485
    %v494 = vadd.f32 %v402, %v486
    %v495 = vadd.f32 %v403, %v487
    %v496 = vadd.f32 %v404, %v488
    %v497 = vadd.f32 %v405, %v489
    %v498 = vadd.f32 %v406, %v490
    %v499 = vadd.f32 %v407, %v491
    %v500 = vld [vmem:[#allocation2 + $0x2b] sm:$0xff]
    %v501 = vld [vmem:[#allocation2 + $0x6b] sm:$0xff]
    %v502 = vld [vmem:[#allocation6 + $0x12] sm:$0x1]
    %v503 = vlaneseq
    %v504 = vshrl.u32 %v503, 7
    %v505 = vsub.s32 0, %v504
    %v506 = vrot.slane %v502, %v505
    %v507 = vmul.f32 %v114, %v506
    %v508 = vmul.f32 %v115, %v506
    %v509 = vmul.f32 %v316, %v506
    %v510 = vmul.f32 %v500, %v506
    %v511 = vmul.f32 %v118, %v506
    %v512 = vmul.f32 %v119, %v506
    %v513 = vmul.f32 %v317, %v506
    %v514 = vmul.f32 %v501, %v506
    %v515 = vadd.f32 %v423, %v507
    %v516 = vadd.f32 %v424, %v508
    %v517 = vadd.f32 %v425, %v509
    %v518 = vadd.f32 %v426, %v510
    %v519 = vadd.f32 %v427, %v511
    %v520 = vadd.f32 %v428, %v512
    %v521 = vadd.f32 %v429, %v513
    %v522 = vadd.f32 %v430, %v514
    %v523 = vld [vmem:[#allocation2 + $0x2c] sm:$0xff]
    %v524 = vld [vmem:[#allocation2 + $0x6c] sm:$0xff]
    %v525 = vld [vmem:[#allocation6 + $0x13] sm:$0x1]
    %v526 = vlaneseq
    %v527 = vshrl.u32 %v526, 7
    %v528 = vsub.s32 0, %v527
    %v529 = vrot.slane %v525, %v528
    %v530 = vmul.f32 %v135, %v529
    %v531 = vmul.f32 %v136, %v529
    %v532 = vmul.f32 %v339, %v529
    %v533 = vmul.f32 %v523, %v529
    %v534 = vmul.f32 %v139, %v529
    %v535 = vmul.f32 %v140, %v529
    %v536 = vmul.f32 %v340, %v529
    %v537 = vmul.f32 %v524, %v529
    %v538 = vadd.f32 %v446, %v530
    %v539 = vadd.f32 %v447, %v531
    %v540 = vadd.f32 %v448, %v532
    %v541 = vadd.f32 %v449, %v533
    %v542 = vadd.f32 %v450, %v534
    %v543 = vadd.f32 %v451, %v535
    %v544 = vadd.f32 %v452, %v536
    %v545 = vadd.f32 %v453, %v537
    %v546 = vld [vmem:[#allocation2 + $0x2d] sm:$0xff]
    %v547 = vld [vmem:[#allocation2 + $0x6d] sm:$0xff]
    %v548 = vld [vmem:[#allocation6 + $0x14] sm:$0x1]
    %v549 = vlaneseq
    %v550 = vshrl.u32 %v549, 7
    %v551 = vsub.s32 0, %v550
    %v552 = vrot.slane %v548, %v551
    %v553 = vmul.f32 %v156, %v552
    %v554 = vmul.f32 %v157, %v552
    %v555 = vmul.f32 %v362, %v552
    %v556 = vmul.f32 %v546, %v552
    %v557 = vmul.f32 %v160, %v552
    %v558 = vmul.f32 %v161, %v552
    %v559 = vmul.f32 %v363, %v552
    %v560 = vmul.f32 %v547, %v552
    %v561 = vadd.f32 %v469, %v553
    %v562 = vadd.f32 %v470, %v554
    %v563 = vadd.f32 %v471, %v555
    %v564 = vadd.f32 %v472, %v556
    %v565 = vadd.f32 %v473, %v557
    %v566 = vadd.f32 %v474, %v558
    %v567 = vadd.f32 %v475, %v559
    %v568 = vadd.f32 %v476, %v560
    %v569 = vld [vmem:[#allocation2 + $0x2e] sm:$0xff]
    %v570 = vld [vmem:[#allocation2 + $0x6e] sm:$0xff]
    %v571 = vld [vmem:[#allocation6 + $0x15] sm:$0x1]
    %v572 = vlaneseq
    %v573 = vshrl.u32 %v572, 7
    %v574 = vsub.s32 0, %v573
    %v575 = vrot.slane %v571, %v574
    %v576 = vmul.f32 %v185, %v575
    %v577 = vmul.f32 %v186, %v575
    %v578 = vmul.f32 %v385, %v575
    %v579 = vmul.f32 %v569, %v575
    %v580 = vmul.f32 %v189, %v575
    %v581 = vmul.f32 %v190, %v575
    %v582 = vmul.f32 %v386, %v575
    %v583 = vmul.f32 %v570, %v575
    %v584 = vadd.f32 %v492, %v576
    %v585 = vadd.f32 %v493, %v577
    %v586 = vadd.f32 %v494, %v578
    %v587 = vadd.f32 %v495, %v579
    %v588 = vadd.f32 %v496, %v580
    %v589 = vadd.f32 %v497, %v581
    %v590 = vadd.f32 %v498, %v582
    %v591 = vadd.f32 %v499, %v583
    %v592 = vld [vmem:[#allocation2 + $0x2f] sm:$0xff]
    %v593 = vld [vmem:[#allocation2 + $0x6f] sm:$0xff]
    %v594 = vld [vmem:[#allocation6 + $0x16] sm:$0x1]
    %v595 = vlaneseq
    %v596 = vshrl.u32 %v595, 7
    %v597 = vsub.s32 0, %v596
    %v598 = vrot.slane %v594, %v597
    %v599 = vmul.f32 %v214, %v598
    %v600 = vmul.f32 %v215, %v598
    %v601 = vmul.f32 %v408, %v598
    %v602 = vmul.f32 %v592, %v598
    %v603 = vmul.f32 %v218, %v598
    %v604 = vmul.f32 %v219, %v598
    %v605 = vmul.f32 %v409, %v598
    %v606 = vmul.f32 %v593, %v598
    %v607 = vadd.f32 %v515, %v599
    %v608 = vadd.f32 %v516, %v600
    %v609 = vadd.f32 %v517, %v601
    %v610 = vadd.f32 %v518, %v602
    %v611 = vadd.f32 %v519, %v603
    %v612 = vadd.f32 %v520, %v604
    %v613 = vadd.f32 %v521, %v605
    %v614 = vadd.f32 %v522, %v606
    %v615 = vld [vmem:[#allocation2 + $0x30] sm:$0xff]
    %v616 = vld [vmem:[#allocation2 + $0x70] sm:$0xff]
    %v617 = vld [vmem:[#allocation6 + $0x17] sm:$0x1]
    %v618 = vlaneseq
    %v619 = vshrl.u32 %v618, 7
    %v620 = vsub.s32 0, %v619
    %v621 = vrot.slane %v617, %v620
    %v622 = vmul.f32 %v243, %v621
    %v623 = vmul.f32 %v244, %v621
    %v624 = vmul.f32 %v431, %v621
    %v625 = vmul.f32 %v615, %v621
    %v626 = vmul.f32 %v247, %v621
    %v627 = vmul.f32 %v248, %v621
    %v628 = vmul.f32 %v432, %v621
    %v629 = vmul.f32 %v616, %v621
    %v630 = vadd.f32 %v538, %v622
    %v631 = vadd.f32 %v539, %v623
    %v632 = vadd.f32 %v540, %v624
    %v633 = vadd.f32 %v541, %v625
    %v634 = vadd.f32 %v542, %v626
    %v635 = vadd.f32 %v543, %v627
    %v636 = vadd.f32 %v544, %v628
    %v637 = vadd.f32 %v545, %v629
    %v638 = vld [vmem:[#allocation2 + $0x31] sm:$0xff]
    %v639 = vld [vmem:[#allocation2 + $0x71] sm:$0xff]
    %v640 = vld [vmem:[#allocation6 + $0x18] sm:$0x1]
    %v641 = vlaneseq
    %v642 = vshrl.u32 %v641, 7
    %v643 = vsub.s32 0, %v642
    %v644 = vrot.slane %v640, %v643
    %v645 = vmul.f32 %v73, %v644
    %v646 = vmul.f32 %v270, %v644
    %v647 = vmul.f32 %v454, %v644
    %v648 = vmul.f32 %v638, %v644
    %v649 = vmul.f32 %v77, %v644
    %v650 = vmul.f32 %v271, %v644
    %v651 = vmul.f32 %v455, %v644
    %v652 = vmul.f32 %v639, %v644
    %v653 = vadd.f32 %v561, %v645
    %v654 = vadd.f32 %v562, %v646
    %v655 = vadd.f32 %v563, %v647
    %v656 = vadd.f32 %v564, %v648
    %v657 = vadd.f32 %v565, %v649
    %v658 = vadd.f32 %v566, %v650
    %v659 = vadd.f32 %v567, %v651
    %v660 = vadd.f32 %v568, %v652
    %v661 = vld [vmem:[#allocation2 + $0x32] sm:$0xff]
    %v662 = vld [vmem:[#allocation2 + $0x72] sm:$0xff]
    %v663 = vld [vmem:[#allocation6 + $0x19] sm:$0x1]
    %v664 = vlaneseq
    %v665 = vshrl.u32 %v664, 7
    %v666 = vsub.s32 0, %v665
    %v667 = vrot.slane %v663, %v666
    %v668 = vmul.f32 %v94, %v667
    %v669 = vmul.f32 %v293, %v667
    %v670 = vmul.f32 %v477, %v667
    %v671 = vmul.f32 %v661, %v667
    %v672 = vmul.f32 %v98, %v667
    %v673 = vmul.f32 %v294, %v667
    %v674 = vmul.f32 %v478, %v667
    %v675 = vmul.f32 %v662, %v667
    %v676 = vadd.f32 %v584, %v668
    %v677 = vadd.f32 %v585, %v669
    %v678 = vadd.f32 %v586, %v670
    %v679 = vadd.f32 %v587, %v671
    %v680 = vadd.f32 %v588, %v672
    %v681 = vadd.f32 %v589, %v673
    %v682 = vadd.f32 %v590, %v674
    %v683 = vadd.f32 %v591, %v675
    %v684 = vld [vmem:[#allocation2 + $0x33] sm:$0xff]
    %v685 = vld [vmem:[#allocation2 + $0x73] sm:$0xff]
    %v686 = vld [vmem:[#allocation6 + $0x1a] sm:$0x1]
    %v687 = vlaneseq
    %v688 = vshrl.u32 %v687, 7
    %v689 = vsub.s32 0, %v688
    %v690 = vrot.slane %v686, %v689
    %v691 = vmul.f32 %v115, %v690
    %v692 = vmul.f32 %v316, %v690
    %v693 = vmul.f32 %v500, %v690
    %v694 = vmul.f32 %v684, %v690
    %v695 = vmul.f32 %v119, %v690
    %v696 = vmul.f32 %v317, %v690
    %v697 = vmul.f32 %v501, %v690
    %v698 = vmul.f32 %v685, %v690
    %v699 = vadd.f32 %v607, %v691
    %v700 = vadd.f32 %v608, %v692
    %v701 = vadd.f32 %v609, %v693
    %v702 = vadd.f32 %v610, %v694
    %v703 = vadd.f32 %v611, %v695
    %v704 = vadd.f32 %v612, %v696
    %v705 = vadd.f32 %v613, %v697
    %v706 = vadd.f32 %v614, %v698
    %v707 = vld [vmem:[#allocation2 + $0x34] sm:$0xff]
    %v708 = vld [vmem:[#allocation2 + $0x74] sm:$0xff]
    %v709 = vld [vmem:[#allocation6 + $0x1b] sm:$0x1]
    %v710 = vlaneseq
    %v711 = vshrl.u32 %v710, 7
    %v712 = vsub.s32 0, %v711
    %v713 = vrot.slane %v709, %v712
    %v714 = vmul.f32 %v136, %v713
    %v715 = vmul.f32 %v339, %v713
    %v716 = vmul.f32 %v523, %v713
    %v717 = vmul.f32 %v707, %v713
    %v718 = vmul.f32 %v140, %v713
    %v719 = vmul.f32 %v340, %v713
    %v720 = vmul.f32 %v524, %v713
    %v721 = vmul.f32 %v708, %v713
    %v722 = vadd.f32 %v630, %v714
    %v723 = vadd.f32 %v631, %v715
    %v724 = vadd.f32 %v632, %v716
    %v725 = vadd.f32 %v633, %v717
    %v726 = vadd.f32 %v634, %v718
    %v727 = vadd.f32 %v635, %v719
    %v728 = vadd.f32 %v636, %v720
    %v729 = vadd.f32 %v637, %v721
    %v730 = vld [vmem:[#allocation2 + $0x35] sm:$0xff]
    %v731 = vld [vmem:[#allocation2 + $0x75] sm:$0xff]
    %v732 = vld [vmem:[#allocation6 + $0x1c] sm:$0x1]
    %v733 = vlaneseq
    %v734 = vshrl.u32 %v733, 7
    %v735 = vsub.s32 0, %v734
    %v736 = vrot.slane %v732, %v735
    %v737 = vmul.f32 %v157, %v736
    %v738 = vmul.f32 %v362, %v736
    %v739 = vmul.f32 %v546, %v736
    %v740 = vmul.f32 %v730, %v736
    %v741 = vmul.f32 %v161, %v736
    %v742 = vmul.f32 %v363, %v736
    %v743 = vmul.f32 %v547, %v736
    %v744 = vmul.f32 %v731, %v736
    %v745 = vadd.f32 %v653, %v737
    %v746 = vadd.f32 %v654, %v738
    %v747 = vadd.f32 %v655, %v739
    %v748 = vadd.f32 %v656, %v740
    %v749 = vadd.f32 %v657, %v741
    %v750 = vadd.f32 %v658, %v742
    %v751 = vadd.f32 %v659, %v743
    %v752 = vadd.f32 %v660, %v744
    %v753 = vld [vmem:[#allocation2 + $0x36] sm:$0xff]
    %v754 = vld [vmem:[#allocation2 + $0x76] sm:$0xff]
    %v755 = vld [vmem:[#allocation6 + $0x1d] sm:$0x1]
    %v756 = vlaneseq
    %v757 = vshrl.u32 %v756, 7
    %v758 = vsub.s32 0, %v757
    %v759 = vrot.slane %v755, %v758
    %v760 = vmul.f32 %v186, %v759
    %v761 = vmul.f32 %v385, %v759
    %v762 = vmul.f32 %v569, %v759
    %v763 = vmul.f32 %v753, %v759
    %v764 = vmul.f32 %v190, %v759
    %v765 = vmul.f32 %v386, %v759
    %v766 = vmul.f32 %v570, %v759
    %v767 = vmul.f32 %v754, %v759
    %v768 = vadd.f32 %v676, %v760
    %v769 = vadd.f32 %v677, %v761
    %v770 = vadd.f32 %v678, %v762
    %v771 = vadd.f32 %v679, %v763
    %v772 = vadd.f32 %v680, %v764
    %v773 = vadd.f32 %v681, %v765
    %v774 = vadd.f32 %v682, %v766
    %v775 = vadd.f32 %v683, %v767
    %v776 = vld [vmem:[#allocation2 + $0x37] sm:$0xff]
    %v777 = vld [vmem:[#allocation2 + $0x77] sm:$0xff]
    %v778 = vld [vmem:[#allocation6 + $0x1e] sm:$0x1]
    %v779 = vlaneseq
    %v780 = vshrl.u32 %v779, 7
    %v781 = vsub.s32 0, %v780
    %v782 = vrot.slane %v778, %v781
    %v783 = vmul.f32 %v215, %v782
    %v784 = vmul.f32 %v408, %v782
    %v785 = vmul.f32 %v592, %v782
    %v786 = vmul.f32 %v776, %v782
    %v787 = vmul.f32 %v219, %v782
    %v788 = vmul.f32 %v409, %v782
    %v789 = vmul.f32 %v593, %v782
    %v790 = vmul.f32 %v777, %v782
    %v791 = vadd.f32 %v699, %v783
    %v792 = vadd.f32 %v700, %v784
    %v793 = vadd.f32 %v701, %v785
    %v794 = vadd.f32 %v702, %v786
    %v795 = vadd.f32 %v703, %v787
    %v796 = vadd.f32 %v704, %v788
    %v797 = vadd.f32 %v705, %v789
    %v798 = vadd.f32 %v706, %v790
    %v799 = vadd.f32 %v745, %v768
    %v800 = vadd.f32 %v746, %v769
    %v801 = vadd.f32 %v747, %v770
    %v802 = vadd.f32 %v748, %v771
    %v803 = vadd.f32 %v749, %v772
    %v804 = vadd.f32 %v750, %v773
    %v805 = vadd.f32 %v751, %v774
    %v806 = vadd.f32 %v752, %v775
    %v807 = vadd.f32 %v791, %v722
    %v808 = vadd.f32 %v792, %v723
    %v809 = vadd.f32 %v793, %v724
    %v810 = vadd.f32 %v794, %v725
    %v811 = vadd.f32 %v795, %v726
    %v812 = vadd.f32 %v796, %v727
    %v813 = vadd.f32 %v797, %v728
    %v814 = vadd.f32 %v798, %v729
    %v815 = vadd.f32 %v799, %v807
    %v816 = vadd.f32 %v800, %v808
    %v817 = vadd.f32 %v801, %v809
    %v818 = vadd.f32 %v802, %v810
    %v819 = vadd.f32 %v803, %v811
    %v820 = vadd.f32 %v804, %v812
    %v821 = vadd.f32 %v805, %v813
    %v822 = vadd.f32 %v806, %v814
    %v823 = vld [vmem:[%s2] sm:$0x1]
    %v825 = vlaneseq
    %v826 = vshrl.u32 %v825, 7
    %v827 = vsub.s32 0, %v826
    %v828 = vrot.slane %v823, %v827
    %v830 = vadd.f32 %v815, %v828
    %v831 = vadd.f32 %v816, %v828
    %v832 = vadd.f32 %v817, %v828
    %v833 = vadd.f32 %v818, %v828
    %v834 = vadd.f32 %v819, %v828
    %v835 = vadd.f32 %v820, %v828
    %v836 = vadd.f32 %v821, %v828
    %v837 = vadd.f32 %v822, %v828
    %838 = vst [vmem:[#allocation9] sm:$0xff] %v830
    %839 = vst [vmem:[#allocation9 + $0x8] sm:$0xff] %v831
    %840 = vst [vmem:[#allocation9 + $0x10] sm:$0xff] %v832
    %841 = vst [vmem:[#allocation9 + $0x18] sm:$0xff] %v833
    %842 = vst [vmem:[#allocation9 + $0x20] sm:$0xff] %v834
    %843 = vst [vmem:[#allocation9 + $0x28] sm:$0xff] %v835
    %844 = vst [vmem:[#allocation9 + $0x30] sm:$0xff] %v836
    %845 = vst [vmem:[#allocation9 + $0x38] sm:$0xff] %v837
    %v846 = vsub.f32 %v54, %v830
    %v847 = vsub.f32 %v55, %v831
    %v848 = vsub.f32 %v56, %v832
    %v849 = vsub.f32 %v57, %v833
    %v850 = vsub.f32 %v58, %v834
    %v851 = vsub.f32 %v59, %v835
    %v852 = vsub.f32 %v60, %v836
    %v853 = vsub.f32 %v61, %v837
    %854 = vst [vmem:[#allocation8] sm:$0xff] %v846
    %855 = vst [vmem:[#allocation8 + $0x8] sm:$0xff] %v847
    %856 = vst [vmem:[#allocation8 + $0x10] sm:$0xff] %v848
    %857 = vst [vmem:[#allocation8 + $0x18] sm:$0xff] %v849
    %858 = vst [vmem:[#allocation8 + $0x20] sm:$0xff] %v850
    %859 = vst [vmem:[#allocation8 + $0x28] sm:$0xff] %v851
    %860 = vst [vmem:[#allocation8 + $0x30] sm:$0xff] %v852
    %861 = vst [vmem:[#allocation8 + $0x38] sm:$0xff] %v853
    // Predicated region
    $region22: #{tpu_custom_call.1} parent=1 // pred_check
      _
    $region23: #{tpu_custom_call.1} parent=1 // pred_check_branch
      %863 = sbr.rel (0) target = $region25
    $region24: #{tpu_custom_call.1} parent=1 // pred_region
      %s865 = ssub.s32 1024, 1024
      %866 = vsyncadd [#allocation5], %s865
      %s867 = sshll.u32 [#allocation8], 4
      %s868 = int_to_ptr.vmem [resolvable:$true] %s867
      %873 = dma.vmem_to_hbm [thread:$0]  %s868, 1024, %s3, [#allocation5], 128, 128, 8
    $region25: #{tpu_custom_call.1} parent=1 // pred_fallthru
      _
    // Predicated region
    $region26: #{tpu_custom_call.1} parent=1 // pred_check
      _
    $region27: #{tpu_custom_call.1} parent=1 // pred_check_branch
      %875 = sbr.rel (0) target = $region29
    $region28: #{tpu_custom_call.1} parent=1 // pred_region
      %s877 = ssub.s32 1024, 1024
      %878 = vsyncadd [#allocation10], %s877
      %s879 = sshll.u32 [#allocation9], 4
      %s880 = int_to_ptr.vmem [resolvable:$true] %s879
      %885 = dma.vmem_to_hbm [thread:$0]  %s880, 1024, %s4, [#allocation10], 128, 128, 8
    $region29: #{tpu_custom_call.1} parent=1 // pred_fallthru
      _
    // Predicated region
    $region30: #{tpu_custom_call.1} parent=1 // pred_check
      _
    $region31: #{tpu_custom_call.1} parent=1 // pred_check_branch
      %887 = sbr.rel (0) target = $region33
    $region32: #{tpu_custom_call.1} parent=1 // pred_region
      %888 = dma.done [#allocation5], 1024
    $region33: #{tpu_custom_call.1} parent=1 // pred_fallthru
      _
    // Predicated region
    $region34: #{tpu_custom_call.1} parent=1 // pred_check
      _
    $region35: #{tpu_custom_call.1} parent=1 // pred_check_branch
      %890 = sbr.rel (0) target = $region37
    $region36: #{tpu_custom_call.1} parent=1 // pred_region
      %891 = dma.done [#allocation10], 1024
    $region37: #{tpu_custom_call.1} parent=1 // pred_fallthru
      _
    %892 = vsyncpa [#allocation4], 1
    %893 = vsyncpa [#allocation7], 1
    %894 = vsyncpa [#allocation5], 1
    %895 = vsyncpa [#allocation10], 1

</llo_original>
